<compile_context>
chip_gen: v5e
topology: v5e:2x2
jax: 0.10.0
libtpu: 0.0.40
codegen_flags: <defaults>
</compile_context>

<pallas_src>
import jax
import jax.numpy as jnp
from jax.experimental import pallas as pl
from jax.experimental.pallas import tpu as pltpu


def _round_up(x, m):
    return ((x + m - 1) // m) * m


def mtb_head_kernel(x_ref, w1_ref, b1_ref, w2_ref, b2_ref, out_ref, acc_ref):
    # Grid = (batch_tiles, k_tiles); k is the reduction over the concat dim 2H.
    k = pl.program_id(1)

    @pl.when(k == 0)
    def _():
        acc_ref[...] = jnp.zeros_like(acc_ref)

    # dense: bf16 x bf16 MXU matmul, f32 accumulation into VMEM scratch.
    acc_ref[...] += jnp.dot(x_ref[...], w1_ref[...],
                            preferred_element_type=jnp.float32)

    @pl.when(k == pl.num_programs(1) - 1)
    def _():
        # bias + tanh in f32 (tanh goes to the EUP slot -> effectively free).
        h = jnp.tanh(acc_ref[...] + b1_ref[...])
        # out_proj into the lane-dense (L padded to 128) output tile.
        y = (jnp.dot(h.astype(w2_ref.dtype), w2_ref[...],
                     preferred_element_type=jnp.float32)
             + b2_ref[...])
        out_ref[...] = y.astype(out_ref.dtype)


def mtb_classification_head(features, markers_mask, params):
    """features: [B, S, H], markers_mask: [B, S] bool (exactly 2 True per row)."""
    B, S, H = features.shape
    w_dense, b_dense = params["w_dense"], params["b_dense"]   # [H, 2H], [H]
    w_out, b_out = params["w_out"], params["b_out"]           # [L, H], [L]
    L = w_out.shape[0]
    twoH = 2 * H

    # --- marker gather as an INDEX gather in the wrapper: marker positions in
    # sequence order (matches torch.masked_select ordering). The kernel never
    # touches the [B, S, H] features tensor.
    # TODO(synk): for very large B*H the gathered x could be produced inside the
    # kernel via PrefetchScalarGridSpec + per-row make_async_copy to avoid the
    # HBM round-trip entirely; emitting it in bf16 here is the cheaper safe fix.
    m = markers_mask.astype(jnp.int32)
    csum = jnp.cumsum(m, axis=1)
    idx1 = jnp.argmax((m == 1) & (csum == 1), axis=1)
    idx2 = jnp.argmax((m == 1) & (csum == 2), axis=1)
    idx = jnp.stack([idx1, idx2], axis=1)                          # [B, 2] int32
    x = jnp.take_along_axis(features, idx[:, :, None], axis=1)     # [B, 2, H]
    x = x.reshape(B, twoH).astype(jnp.bfloat16)                    # [B, 2H] bf16

    # --- lane-dense padding of every contraction / output dim.
    H_pad = _round_up(H, 128)
    L_pad = _round_up(L, 128)
    if twoH <= 2048:
        TK = _round_up(twoH, 128)      # single K tile
        K_pad = TK
    else:
        TK = 2048                      # bounded per-step weight slab
        K_pad = _round_up(twoH, TK)
    num_k = K_pad // TK

    # --- parameter prep: PyTorch Linear is y = x @ W.T + b, so pre-transpose.
    # Weights in bf16 (MXU), biases in f32. Zero padding keeps padded rows/cols
    # numerically inert (tanh(0)=0 and the padded w2 rows are zero anyway).
    w1 = (jnp.zeros((K_pad, H_pad), jnp.bfloat16)
          .at[:twoH, :H].set(w_dense.T.astype(jnp.bfloat16)))      # [K_pad, H_pad]
    b1 = (jnp.zeros((1, H_pad), jnp.float32)
          .at[:, :H].set(b_dense.astype(jnp.float32)))             # [1, H_pad]
    w2 = (jnp.zeros((H_pad, L_pad), jnp.bfloat16)
          .at[:H, :L].set(w_out.T.astype(jnp.bfloat16)))           # [H_pad, L_pad]
    b2 = (jnp.zeros((1, L_pad), jnp.float32)
          .at[:, :L].set(b_out.astype(jnp.float32)))               # [1, L_pad]

    # --- batch tiling: TB multiple of 8 (sublane), capped at 512; force the
    # grid to have >= 2 batch tiles so both v7x TensorCores get work.
    TB = min(512, max(8, _round_up(-(-B // 2), 8)))
    B_pad = _round_up(B, TB)
    if B_pad // TB < 2:
        B_pad = 2 * TB
    x = jnp.pad(x, ((0, B_pad - B), (0, K_pad - twoH)))

    # --- VMEM budget from the actual live-buffer footprint (+ headroom).
    w1_bufs = 1 if num_k == 1 else 2
    vmem_need = (
        TB * TK * 2 * 2            # x tile, bf16, double-buffered
        + TK * H_pad * 2 * w1_bufs # dense weight tile, bf16
        + H_pad * 4                # dense bias, f32
        + H_pad * L_pad * 2        # out_proj weight, bf16, single-buffered
        + L_pad * 4                # out_proj bias, f32
        + TB * L_pad * 4 * 2       # output tile, f32, double-buffered
        + TB * H_pad * 4           # f32 accumulator scratch
    )
    vmem_limit = max(16 * 1024 * 1024,
                     min(56 * 1024 * 1024, vmem_need + 8 * 1024 * 1024))

    w1_mode = pl.Buffered(1) if num_k == 1 else pl.Buffered(2)

    out = pl.pallas_call(
        mtb_head_kernel,
        out_shape=jax.ShapeDtypeStruct((B_pad, L_pad), jnp.float32),
        grid=(B_pad // TB, num_k),
        in_specs=[
            pl.BlockSpec((TB, TK), lambda i, k: (i, k)),                # gathered x
            pl.BlockSpec((TK, H_pad), lambda i, k: (k, 0),
                         pipeline_mode=w1_mode),                        # dense weight
            pl.BlockSpec((1, H_pad), lambda i, k: (0, 0),
                         pipeline_mode=pl.Buffered(1)),                 # dense bias
            pl.BlockSpec((H_pad, L_pad), lambda i, k: (0, 0),
                         pipeline_mode=pl.Buffered(1)),                 # out_proj weight
            pl.BlockSpec((1, L_pad), lambda i, k: (0, 0),
                         pipeline_mode=pl.Buffered(1)),                 # out_proj bias
        ],
        out_specs=pl.BlockSpec((TB, L_pad), lambda i, k: (i, 0)),
        scratch_shapes=[pltpu.VMEM((TB, H_pad), jnp.float32)],
        compiler_params=pltpu.CompilerParams(
            dimension_semantics=("parallel", "arbitrary"),
            vmem_limit_bytes=int(vmem_limit),
        ),
    )(x, w1, b1, w2, b2)

    out = out[:B, :L]

    # PyTorch asserts every row has exactly 2 markers; a traced kernel can't
    # assert, so poison invalid rows with NaN instead of returning garbage.
    valid = markers_mask.astype(jnp.int32).sum(axis=1) == 2
    out = jnp.where(valid[:, None], out, jnp.nan)
    return out


def _reference(features, markers_mask, params):
    """Pure-JAX f32 reference mirroring the PyTorch forward (eval mode)."""
    B, S, H = features.shape
    m = markers_mask.astype(jnp.int32)
    csum = jnp.cumsum(m, axis=1)
    sel1 = ((m == 1) & (csum == 1)).astype(features.dtype)
    sel2 = ((m == 1) & (csum == 2)).astype(features.dtype)
    x1 = jnp.einsum("bs,bsh->bh", sel1, features)
    x2 = jnp.einsum("bs,bsh->bh", sel2, features)
    x = jnp.concatenate([x1, x2], axis=-1)                 # [B, 2H]
    h = jnp.tanh(x @ params["w_dense"].T + params["b_dense"])
    return h @ params["w_out"].T + params["b_out"]


if __name__ == "__main__":
    # Small config: batch=2, seq=8, hidden=32, num_labels=3
    B, S, H, L = 2, 8, 32, 3

    key = jax.random.PRNGKey(0)
    k_feat, k_wd, k_bd, k_wo, k_bo = jax.random.split(key, 5)

    features = jax.random.normal(k_feat, (B, S, H), dtype=jnp.float32)

    # Exactly two markers per row (positions 1 & 5 for row 0, 2 & 6 for row 1).
    markers_mask = jnp.zeros((B, S), dtype=jnp.bool_)
    markers_mask = markers_mask.at[0, 1].set(True).at[0, 5].set(True)
    markers_mask = markers_mask.at[1, 2].set(True).at[1, 6].set(True)

    params = {
        "w_dense": jax.random.normal(k_wd, (H, 2 * H), dtype=jnp.float32) * 0.05,
        "b_dense": jax.random.normal(k_bd, (H,), dtype=jnp.float32) * 0.05,
        "w_out": jax.random.normal(k_wo, (L, H), dtype=jnp.float32) * 0.05,
        "b_out": jax.random.normal(k_bo, (L,), dtype=jnp.float32) * 0.05,
    }

    run = jax.jit(mtb_classification_head)
    out = jax.block_until_ready(run(features, markers_mask, params))

    ref = _reference(features, markers_mask, params)
    assert out.shape == (B, L)
    # bf16 matmul operands (f32 accumulation) -> slightly looser tolerance.
    assert jnp.allclose(out, ref, atol=2e-2, rtol=2e-2), (out, ref)

    # Note: nn.Dropout is identity in eval mode, so it is a no-op here.
    print("KERNEL_OK")
</pallas_src>

<mosaic_0001>
module attributes {stable_mosaic.version = 11 : i64} {
  func.func @mtb_head_kernel(%arg0: i32, %arg1: i32, %arg2: memref<8x128xbf16, #tpu.memory_space<vmem>>, %arg3: memref<128x128xbf16, #tpu.memory_space<vmem>>, %arg4: memref<1x128xf32, #tpu.memory_space<vmem>>, %arg5: memref<128x128xbf16, #tpu.memory_space<vmem>>, %arg6: memref<1x128xf32, #tpu.memory_space<vmem>>, %arg7: memref<8x128xf32, #tpu.memory_space<vmem>>, %arg8: memref<8x128xf32, #tpu.memory_space<vmem>>) attributes {dimension_semantics = [#tpu.dimension_semantics<parallel>, #tpu.dimension_semantics<arbitrary>], iteration_bounds = array<i64: 2, 1>, scalar_prefetch = 0 : i64, scratch_operands = 1 : i64, tpu.core_type = #tpu.core_type<tc>, window_params = [{transform_indices = @transform_0, window_bounds = array<i64: 8, 128>}, {pipeline_mode = #tpu.pipeline_mode<synchronous>, transform_indices = @transform_1, window_bounds = array<i64: 128, 128>}, {pipeline_mode = #tpu.pipeline_mode<synchronous>, transform_indices = @transform_2, window_bounds = array<i64: 1, 128>}, {pipeline_mode = #tpu.pipeline_mode<synchronous>, transform_indices = @transform_3, window_bounds = array<i64: 128, 128>}, {pipeline_mode = #tpu.pipeline_mode<synchronous>, transform_indices = @transform_4, window_bounds = array<i64: 1, 128>}, {transform_indices = @transform_5, window_bounds = array<i64: 8, 128>}]} {
    %c0_i32 = arith.constant 0 : i32
    %0 = arith.cmpi eq, %arg1, %c0_i32 : i32
    %1 = arith.extui %0 : i1 to i32
    %c0_i32_0 = arith.constant 0 : i32
    %2 = arith.cmpi ne, %1, %c0_i32_0 : i32
    scf.if %2 {
      %cst_10 = arith.constant 0.000000e+00 : f32
      %12 = vector.broadcast %cst_10 : f32 to vector<8x128xf32>
      %c0_11 = arith.constant 0 : index
      %c0_12 = arith.constant 0 : index
      %13 = vector.load %arg8[%c0_11, %c0_12] : memref<8x128xf32, #tpu.memory_space<vmem>>, vector<8x128xf32>
      tpu.vector_store %arg8[%c0_11, %c0_12], %12 {strides = array<i32>} : memref<8x128xf32, #tpu.memory_space<vmem>>, vector<8x128xf32>,
    } else {
    }
    %c0 = arith.constant 0 : index
    %c0_1 = arith.constant 0 : index
    %3 = vector.load %arg8[%c0, %c0_1] : memref<8x128xf32, #tpu.memory_space<vmem>>, vector<8x128xf32>
    %c0_2 = arith.constant 0 : index
    %c0_3 = arith.constant 0 : index
    %4 = vector.load %arg2[%c0_2, %c0_3] : memref<8x128xbf16, #tpu.memory_space<vmem>>, vector<8x128xbf16>
    %c0_4 = arith.constant 0 : index
    %c0_5 = arith.constant 0 : index
    %5 = vector.load %arg3[%c0_4, %c0_5] : memref<128x128xbf16, #tpu.memory_space<vmem>>, vector<128x128xbf16>
    %cst = arith.constant dense<0.000000e+00> : vector<8x128xf32>
    %6 = tpu.matmul %4, %5, %cst {dimension_numbers = #tpu.dot_dimension_numbers<[1], [0], [0], [1], [0, 0, 1, 1], [], []>} : vector<8x128xbf16>, vector<128x128xbf16>, vector<8x128xf32> -> vector<8x128xf32>
    %7 = arith.addf %3, %6 : vector<8x128xf32>
    %c0_6 = arith.constant 0 : index
    %c0_7 = arith.constant 0 : index
    %8 = vector.load %arg8[%c0_6, %c0_7] : memref<8x128xf32, #tpu.memory_space<vmem>>, vector<8x128xf32>
    tpu.vector_store %arg8[%c0_6, %c0_7], %7 {strides = array<i32>} : memref<8x128xf32, #tpu.memory_space<vmem>>, vector<8x128xf32>,
    %c0_i32_8 = arith.constant 0 : i32
    %9 = arith.cmpi eq, %arg1, %c0_i32_8 : i32
    %10 = arith.extui %9 : i1 to i32
    %c0_i32_9 = arith.constant 0 : i32
    %11 = arith.cmpi ne, %10, %c0_i32_9 : i32
    scf.if %11 {
      %c0_10 = arith.constant 0 : index
      %c0_11 = arith.constant 0 : index
      %12 = vector.load %arg8[%c0_10, %c0_11] : memref<8x128xf32, #tpu.memory_space<vmem>>, vector<8x128xf32>
      %c0_12 = arith.constant 0 : index
      %c0_13 = arith.constant 0 : index
      %13 = vector.load %arg4[%c0_12, %c0_13] : memref<1x128xf32, #tpu.memory_space<vmem>>, vector<1x128xf32>
      %14 = vector.broadcast %13 : vector<1x128xf32> to vector<8x128xf32>
      %15 = arith.addf %12, %14 : vector<8x128xf32>
      %16 = math.tanh %15 : vector<8x128xf32>
      %17 = arith.truncf %16 : vector<8x128xf32> to vector<8x128xbf16>
      %c0_14 = arith.constant 0 : index
      %c0_15 = arith.constant 0 : index
      %18 = vector.load %arg5[%c0_14, %c0_15] : memref<128x128xbf16, #tpu.memory_space<vmem>>, vector<128x128xbf16>
      %cst_16 = arith.constant dense<0.000000e+00> : vector<8x128xf32>
      %19 = tpu.matmul %17, %18, %cst_16 {dimension_numbers = #tpu.dot_dimension_numbers<[1], [0], [0], [1], [0, 0, 1, 1], [], []>} : vector<8x128xbf16>, vector<128x128xbf16>, vector<8x128xf32> -> vector<8x128xf32>
      %c0_17 = arith.constant 0 : index
      %c0_18 = arith.constant 0 : index
      %20 = vector.load %arg6[%c0_17, %c0_18] : memref<1x128xf32, #tpu.memory_space<vmem>>, vector<1x128xf32>
      %21 = vector.broadcast %20 : vector<1x128xf32> to vector<8x128xf32>
      %22 = arith.addf %19, %21 : vector<8x128xf32>
      %c0_19 = arith.constant 0 : index
      %c0_20 = arith.constant 0 : index
      %23 = vector.load %arg7[%c0_19, %c0_20] : memref<8x128xf32, #tpu.memory_space<vmem>>, vector<8x128xf32>
      tpu.vector_store %arg7[%c0_19, %c0_20], %22 {strides = array<i32>} : memref<8x128xf32, #tpu.memory_space<vmem>>, vector<8x128xf32>,
    } else {
    }
    return
  }
  func.func @transform_0(%arg0: i32, %arg1: i32) -> (i32, i32) {
    %c0_i32 = arith.constant 0 : i32
    return %arg0, %arg1 : i32, i32
  }
  func.func @transform_1(%arg0: i32, %arg1: i32) -> (i32, i32) {
    %c0_i32 = arith.constant 0 : i32
    %c0_i32_0 = arith.constant 0 : i32
    return %arg1, %c0_i32 : i32, i32
  }
  func.func @transform_2(%arg0: i32, %arg1: i32) -> (i32, i32) {
    %c0_i32 = arith.constant 0 : i32
    %c0_i32_0 = arith.constant 0 : i32
    %c0_i32_1 = arith.constant 0 : i32
    return %c0_i32, %c0_i32_0 : i32, i32
  }
  func.func @transform_3(%arg0: i32, %arg1: i32) -> (i32, i32) {
    %c0_i32 = arith.constant 0 : i32
    %c0_i32_0 = arith.constant 0 : i32
    %c0_i32_1 = arith.constant 0 : i32
    return %c0_i32, %c0_i32_0 : i32, i32
  }
  func.func @transform_4(%arg0: i32, %arg1: i32) -> (i32, i32) {
    %c0_i32 = arith.constant 0 : i32
    %c0_i32_0 = arith.constant 0 : i32
    %c0_i32_1 = arith.constant 0 : i32
    return %c0_i32, %c0_i32_0 : i32, i32
  }
  func.func @transform_5(%arg0: i32, %arg1: i32) -> (i32, i32) {
    %c0_i32 = arith.constant 0 : i32
    %c0_i32_0 = arith.constant 0 : i32
    return %arg0, %c0_i32 : i32, i32
  }
}

</mosaic_0001>

<llo_original>
// kernel: mtb_classification_head.1
$region0: #{mtb_classification_head.1}
  #allocation0 [shape = 'u32[]', space=smem, size = 0x4, offset = 0x4, fixed_abs, tag = 'smem constant byte address 0x4 - core index']
  #allocation1 [shape = 'u32[72,128]{1,0:T(1,128)}', space=vmem, size = 0x9000, scoped, tag = 'internal scratch']
  #allocation2 [shape = 'f32[8,128]{1,0:T(8,128)}', space=vmem, size = 0x1000, scoped, tag = 'scratch operand']
  %s0 = inlined_call_operand.vmem [shape: bf16[16,128], index: 0, kind: input, shape index: {}]
  %s1 = inlined_call_operand.vmem [shape: bf16[128,128], index: 1, kind: input, shape index: {}]
  %s2 = inlined_call_operand.vmem [shape: f32[1,128], index: 2, kind: input, shape index: {}]
  %s3 = inlined_call_operand.vmem [shape: bf16[128,128], index: 3, kind: input, shape index: {}]
  %s4 = inlined_call_operand.vmem [shape: f32[1,128], index: 4, kind: input, shape index: {}]
  %s5 = inlined_call_operand.vmem [shape: f32[16,128], index: 5, kind: output, shape index: {}]
  %s6 = sld [smem:[#allocation0]]
  $region61: #{mtb_classification_head.1} parent=0
    _
  %s8 = ssub.s32 1, %s6
  %s9 = scalar_select 0, %s8, %s6
  loop: start=0, step=1, limit=4
  $region2: #{mtb_classification_head.1} parent=0 // loop_pre_header
    _
  $region3: #{mtb_classification_head.1} parent=0 // loop_header
    %s11 = sphi 0, %s15
    %p12 = scmp.ge.s32.totalorder %s11, 4
    %s18 = sphi 0, %s30
    %s19 = sphi 0, %s26
    %s20 = sphi 0, %s18
    %s21 = sphi 0, %s19
    %s22 = sphi 0, %s20
    %s23 = sphi 0, %s21
    %s35 = sphi 0, %s37
    %s38 = sphi 0, %s35
    %s39 = sphi 0, %s38
    %s55 = sphi 0, %s39
    %s61 = sphi 0, %s63
    %s64 = sphi 0, %s61
    %s65 = sphi 0, %s64
    %s81 = sphi 0, %s65
    %s85 = sphi 0, %s85
    %s87 = sphi 0, %s85
    %s88 = sphi 0, %s87
    %s102 = sphi 0, %s88
    %s106 = sphi 0, %s106
    %s108 = sphi 0, %s106
    %s109 = sphi 0, %s108
    %s123 = sphi 0, %s109
    %s127 = sphi 0, %s127
    %s129 = sphi 0, %s127
    %s130 = sphi 0, %s129
    %s144 = sphi 0, %s130
    %s150 = sphi 0, %s152
    %s153 = sphi 0, %s150
    %s154 = sphi 0, %s153
    %s170 = sphi 0, %s154
  $region4: #{mtb_classification_head.1} parent=0 // loop_header_branch
    %14 = sbr.rel (%p12) target = $region8
  $region5: #{mtb_classification_head.1} parent=0 // loop_body
    %s16 = ssub.s32 %s11, 1
    %s17 = ssub.s32 %s11, 2
    %s24 = sadd.s32 1, %s19
    %p25 = scmp.ge.s32.totalorder %s24, 1
    %s26 = scalar_select %p25, 0, %s24
    %s27 = sadd.s32 1, %s18
    %s28 = scalar_select %p25, %s27, %s18
    %p29 = scmp.ge.s32.totalorder %s28, 2
    %s30 = scalar_select %p29, 0, %s28
    %s31 = ssub.s32 %s18, %s30
    %s32 = ssub.s32 %s19, %s26
    %s33 = sor.u32 %s31, %s32
    %p34 = scmp.eq.s32.totalorder %s33, 0
    %s36 = sadd.s32 %s35, 1
    %s37 = scalar_select %p34, %s35, %s36
    %p40 = pneg %p34
    %p41 = scmp.eq.s32.totalorder %s11, 1
    %p42 = por %p40, %p41
    %p43 = scmp.ne.s32.totalorder %s35, %s38
    %p44 = scmp.eq.s32.totalorder %s11, 0
    %p45 = por %p43, %p44
    %p46 = scmp.ne.s32.totalorder %s35, %s38
    %p47 = scmp.eq.s32.totalorder %s16, 1
    %p48 = por %p46, %p47
    %p49 = scmp.ne.s32.totalorder %s38, %s39
    %p50 = scmp.eq.s32.totalorder %s16, 0
    %p51 = por %p49, %p50
    %p52 = scmp.ne.s32.totalorder %s38, %s39
    %p53 = scmp.eq.s32.totalorder %s17, 1
    %p54 = por %p52, %p53
    %p56 = scmp.ne.s32.totalorder %s39, %s55
    %p57 = scmp.eq.s32.totalorder %s17, 0
    %p58 = por %p56, %p57
    %s59 = ssub.s32 %s19, %s26
    %p60 = scmp.eq.s32.totalorder %s59, 0
    %s62 = sadd.s32 %s61, 1
    %s63 = scalar_select %p60, %s61, %s62
    %p66 = pneg %p60
    %p67 = scmp.eq.s32.totalorder %s11, 1
    %p68 = por %p66, %p67
    %p69 = scmp.ne.s32.totalorder %s61, %s64
    %p70 = scmp.eq.s32.totalorder %s11, 0
    %p71 = por %p69, %p70
    %p72 = scmp.ne.s32.totalorder %s61, %s64
    %p73 = scmp.eq.s32.totalorder %s16, 1
    %p74 = por %p72, %p73
    %p75 = scmp.ne.s32.totalorder %s64, %s65
    %p76 = scmp.eq.s32.totalorder %s16, 0
    %p77 = por %p75, %p76
    %p78 = scmp.ne.s32.totalorder %s64, %s65
    %p79 = scmp.eq.s32.totalorder %s17, 1
    %p80 = por %p78, %p79
    %p82 = scmp.ne.s32.totalorder %s65, %s81
    %p83 = scmp.eq.s32.totalorder %s17, 0
    %p84 = por %p82, %p83
    %s86 = sadd.s32 %s85, 1
    %p89 = scmp.eq.s32.totalorder %s11, 1
    %p90 = scmp.ne.s32.totalorder %s85, %s87
    %p91 = scmp.eq.s32.totalorder %s11, 0
    %p92 = por %p90, %p91
    %p93 = scmp.ne.s32.totalorder %s85, %s87
    %p94 = scmp.eq.s32.totalorder %s16, 1
    %p95 = por %p93, %p94
    %p96 = scmp.ne.s32.totalorder %s87, %s88
    %p97 = scmp.eq.s32.totalorder %s16, 0
    %p98 = por %p96, %p97
    %p99 = scmp.ne.s32.totalorder %s87, %s88
    %p100 = scmp.eq.s32.totalorder %s17, 1
    %p101 = por %p99, %p100
    %p103 = scmp.ne.s32.totalorder %s88, %s102
    %p104 = scmp.eq.s32.totalorder %s17, 0
    %p105 = por %p103, %p104
    %s107 = sadd.s32 %s106, 1
    %p110 = scmp.eq.s32.totalorder %s11, 1
    %p111 = scmp.ne.s32.totalorder %s106, %s108
    %p112 = scmp.eq.s32.totalorder %s11, 0
    %p113 = por %p111, %p112
    %p114 = scmp.ne.s32.totalorder %s106, %s108
    %p115 = scmp.eq.s32.totalorder %s16, 1
    %p116 = por %p114, %p115
    %p117 = scmp.ne.s32.totalorder %s108, %s109
    %p118 = scmp.eq.s32.totalorder %s16, 0
    %p119 = por %p117, %p118
    %p120 = scmp.ne.s32.totalorder %s108, %s109
    %p121 = scmp.eq.s32.totalorder %s17, 1
    %p122 = por %p120, %p121
    %p124 = scmp.ne.s32.totalorder %s109, %s123
    %p125 = scmp.eq.s32.totalorder %s17, 0
    %p126 = por %p124, %p125
    %s128 = sadd.s32 %s127, 1
    %p131 = scmp.eq.s32.totalorder %s11, 1
    %p132 = scmp.ne.s32.totalorder %s127, %s129
    %p133 = scmp.eq.s32.totalorder %s11, 0
    %p134 = por %p132, %p133
    %p135 = scmp.ne.s32.totalorder %s127, %s129
    %p136 = scmp.eq.s32.totalorder %s16, 1
    %p137 = por %p135, %p136
    %p138 = scmp.ne.s32.totalorder %s129, %s130
    %p139 = scmp.eq.s32.totalorder %s16, 0
    %p140 = por %p138, %p139
    %p141 = scmp.ne.s32.totalorder %s129, %s130
    %p142 = scmp.eq.s32.totalorder %s17, 1
    %p143 = por %p141, %p142
    %p145 = scmp.ne.s32.totalorder %s130, %s144
    %p146 = scmp.eq.s32.totalorder %s17, 0
    %p147 = por %p145, %p146
    %s148 = ssub.s32 %s18, %s30
    %p149 = scmp.eq.s32.totalorder %s148, 0
    %s151 = sadd.s32 %s150, 1
    %s152 = scalar_select %p149, %s150, %s151
    %p155 = pneg %p149
    %p156 = scmp.eq.s32.totalorder %s11, 1
    %p157 = por %p155, %p156
    %p158 = scmp.ne.s32.totalorder %s150, %s153
    %p159 = scmp.eq.s32.totalorder %s11, 0
    %p160 = por %p158, %p159
    %p161 = scmp.ne.s32.totalorder %s150, %s153
    %p162 = scmp.eq.s32.totalorder %s16, 1
    %p163 = por %p161, %p162
    %p164 = scmp.ne.s32.totalorder %s153, %s154
    %p165 = scmp.eq.s32.totalorder %s16, 0
    %p166 = por %p164, %p165
    %p167 = scmp.ne.s32.totalorder %s153, %s154
    %p168 = scmp.eq.s32.totalorder %s17, 1
    %p169 = por %p167, %p168
    %p171 = scmp.ne.s32.totalorder %s154, %s170
    %p172 = scmp.eq.s32.totalorder %s17, 0
    %p173 = por %p171, %p172
    %p174 = scmp.le.s32.totalorder 1, %s11
    %p175 = scmp.lt.s32.totalorder %s11, 3
    %p176 = pnand %p174, %p175
    %p177 = pneg %p176
    // Predicated region
    $region9: #{mtb_classification_head.1} parent=5 // pred_check
      _
    $region10: #{mtb_classification_head.1} parent=5 // pred_check_branch
      %179 = sbr.rel (%p176) target = $region12
    $region11: #{mtb_classification_head.1} parent=5 // pred_region
      %s180 = ssub.s32 %s11, 1
      // Predicated region
      $region13: #{mtb_classification_head.1} parent=11 // pred_check
        %p181 = pneg %p77
      $region14: #{mtb_classification_head.1} parent=11 // pred_check_branch
        %183 = sbr.rel (%p181) target = $region16
      $region15: #{mtb_classification_head.1} parent=11 // pred_region
        %s184 = smul.u32 16, %s21
        %p185 = scmp.lt.s32.totalorder %s184, 15
        %s186 = scalar_select %p185, %s184, 15
        %s187 = smul.addr %s186, 4
        %s188 = scalar_lea.vmem %s1, %s187
        %s189 = smul.u32 16, %s21
      $region16: #{mtb_classification_head.1} parent=11 // pred_fallthru
        _
      // Predicated region
      $region17: #{mtb_classification_head.1} parent=11 // pred_check
        %p190 = pneg %p98
      $region18: #{mtb_classification_head.1} parent=11 // pred_check_branch
        %192 = sbr.rel (%p190) target = $region20
      $region19: #{mtb_classification_head.1} parent=11 // pred_region
        _
      $region20: #{mtb_classification_head.1} parent=11 // pred_fallthru
        _
      // Predicated region
      $region21: #{mtb_classification_head.1} parent=11 // pred_check
        %p193 = pneg %p119
      $region22: #{mtb_classification_head.1} parent=11 // pred_check_branch
        %195 = sbr.rel (%p193) target = $region24
      $region23: #{mtb_classification_head.1} parent=11 // pred_region
        _
      $region24: #{mtb_classification_head.1} parent=11 // pred_fallthru
        _
      // Predicated region
      $region25: #{mtb_classification_head.1} parent=11 // pred_check
        %p196 = pneg %p140
      $region26: #{mtb_classification_head.1} parent=11 // pred_check_branch
        %198 = sbr.rel (%p196) target = $region28
      $region27: #{mtb_classification_head.1} parent=11 // pred_region
        _
      $region28: #{mtb_classification_head.1} parent=11 // pred_fallthru
        _
    $region12: #{mtb_classification_head.1} parent=5 // pred_fallthru
      _
    %p199 = scmp.lt.s32.totalorder %s11, 2
    // Predicated region
    $region29: #{mtb_classification_head.1} parent=5 // pred_check
      %p200 = pneg %p199
    $region30: #{mtb_classification_head.1} parent=5 // pred_check_branch
      %202 = sbr.rel (%p200) target = $region32
    $region31: #{mtb_classification_head.1} parent=5 // pred_region
      // Predicated region
      $region33: #{mtb_classification_head.1} parent=31 // pred_check
        %p203 = pneg %p45
      $region34: #{mtb_classification_head.1} parent=31 // pred_check_branch
        %205 = sbr.rel (%p203) target = $region36
      $region35: #{mtb_classification_head.1} parent=31 // pred_region
        %p206 = scmp.lt.s32.totalorder %s18, 1
        %s207 = scalar_select %p206, %s18, 1
        %p208 = scmp.lt.s32.totalorder %s19, 0
        %s209 = scalar_select %p208, %s19, 0
        %s210 = sadd.s32 %s209, %s207
        %s211 = smul.addr %s210, 4
        %s212 = scalar_lea.vmem %s0, %s211
      $region36: #{mtb_classification_head.1} parent=31 // pred_fallthru
        _
    $region32: #{mtb_classification_head.1} parent=5 // pred_fallthru
      _
    %p213 = scmp.le.s32.totalorder 1, %s11
    %p214 = scmp.lt.s32.totalorder %s11, 3
    %p215 = pnand %p213, %p214
    %p216 = pneg %p215
    // Predicated region
    $region37: #{mtb_classification_head.1} parent=5 // pred_check
      _
    $region38: #{mtb_classification_head.1} parent=5 // pred_check_branch
      %218 = sbr.rel (%p215) target = $region40
    $region39: #{mtb_classification_head.1} parent=5 // pred_region
      %s219 = ssub.s32 %s11, 1
      %p220 = scmp.lt.s32.totalorder %s20, 1
      %s221 = scalar_select %p220, %s20, 1
      %p222 = scmp.lt.s32.totalorder %s21, 0
      %s223 = scalar_select %p222, %s21, 0
      %s224 = sadd.s32 %s223, %s221
      %s225 = smul.addr %s224, 4
      %s226 = scalar_lea.vmem %s0, %s225
      %p227 = pneg %p51
      %p228 = pneg %p48
      %s229 = smul.u32 16, %s21
      %p230 = scmp.lt.s32.totalorder %s229, 15
      %s231 = scalar_select %p230, %s229, 15
      %s232 = smul.addr %s231, 4
      %s233 = scalar_lea.vmem %s1, %s232
      %p234 = pneg %p77
      %p235 = pneg %p74
      %p236 = pneg %p98
      %p237 = pneg %p95
      %p238 = pneg %p119
      %p239 = pneg %p116
      %p240 = pneg %p140
      %p241 = pneg %p137
      %p242 = pneg %p166
      %p243 = pneg %p163
      %p244 = scmp.lt.s32.totalorder %s20, 1
      %s245 = scalar_select %p244, %s20, 1
      %s246 = smul.addr %s245, 8
      %s247 = scalar_lea.vmem %s5, %s246
      %p248 = scmp.lt.s32.totalorder %s20, 1
      %s249 = scalar_select %p248, %s20, 1
      %p250 = scmp.lt.s32.totalorder %s21, 0
      %s251 = scalar_select %p250, %s21, 0
      %s252 = sadd.s32 %s251, %s249
      %s253 = smul.addr %s252, 4
      %s254 = scalar_lea.vmem %s0, %s253
      %s255 = smul.u32 16, %s21
      %p256 = scmp.lt.s32.totalorder %s255, 15
      %s257 = scalar_select %p256, %s255, 15
      %s258 = smul.addr %s257, 4
      %s259 = scalar_lea.vmem %s1, %s258
      %s260 = smul.u32 16, %s21
      %p261 = scmp.lt.s32.totalorder %s20, 1
      %s262 = scalar_select %p261, %s20, 1
      %s263 = smul.addr %s262, 8
      %s264 = scalar_lea.vmem %s5, %s263
      %p265 = scmp.eq.s32.totalorder %s21, 0
      // Predicated region
      $region41: #{mtb_classification_head.1} parent=39 // pred_check
        %p266 = pneg %p265
      $region42: #{mtb_classification_head.1} parent=39 // pred_check_branch
        %268 = sbr.rel (%p266) target = $region44
      $region43: #{mtb_classification_head.1} parent=39 // pred_region
        %269 = vst [vmem:[#allocation2] sm:$0xff] 0.0
      $region44: #{mtb_classification_head.1} parent=39 // pred_fallthru
        _
      %v270 = vld [vmem:[#allocation2] sm:$0xff]
      %v271 = vld [vmem:[%s254] sm:$0xf]
      %v272 = vld [vmem:[%s259] sm:$0xf]
      %v273 = vld [vmem:[%s259 + $0x4] sm:$0xf]
      %v274 = vld [vmem:[%s259 + $0x8] sm:$0xf]
      %v275 = vld [vmem:[%s259 + $0xc] sm:$0xf]
      %v276 = vld [vmem:[%s259 + $0x10] sm:$0xf]
      %v277 = vld [vmem:[%s259 + $0x14] sm:$0xf]
      %v278 = vld [vmem:[%s259 + $0x18] sm:$0xf]
      %v279 = vld [vmem:[%s259 + $0x1c] sm:$0xf]
      %v280 = vld [vmem:[%s259 + $0x20] sm:$0xf]
      %v281 = vld [vmem:[%s259 + $0x24] sm:$0xf]
      %v282 = vld [vmem:[%s259 + $0x28] sm:$0xf]
      %v283 = vld [vmem:[%s259 + $0x2c] sm:$0xf]
      %v284 = vld [vmem:[%s259 + $0x30] sm:$0xf]
      %v285 = vld [vmem:[%s259 + $0x34] sm:$0xf]
      %v286 = vld [vmem:[%s259 + $0x38] sm:$0xf]
      %v287 = vld [vmem:[%s259 + $0x3c] sm:$0xf]
      %v304 = vunpack.c.l.b16 %v272
      %v305 = vunpack.c.l.b16 %v273
      %v306 = vunpack.c.l.b16 %v274
      %v307 = vunpack.c.l.b16 %v275
      %v308 = vunpack.c.l.b16 %v276
      %v309 = vunpack.c.l.b16 %v277
      %v310 = vunpack.c.l.b16 %v278
      %v311 = vunpack.c.l.b16 %v279
      %v312 = vunpack.c.l.b16 %v280
      %v313 = vunpack.c.l.b16 %v281
      %v314 = vunpack.c.l.b16 %v282
      %v315 = vunpack.c.l.b16 %v283
      %v316 = vunpack.c.l.b16 %v284
      %v317 = vunpack.c.l.b16 %v285
      %v318 = vunpack.c.l.b16 %v286
      %v319 = vunpack.c.l.b16 %v287
      %v320 = vpack.c.b16 %v305, %v304
      %v321 = vpack.c.b16 %v307, %v306
      %v322 = vpack.c.b16 %v309, %v308
      %v323 = vpack.c.b16 %v311, %v310
      %v324 = vpack.c.b16 %v313, %v312
      %v325 = vpack.c.b16 %v315, %v314
      %v326 = vpack.c.b16 %v317, %v316
      %v327 = vpack.c.b16 %v319, %v318
      %336 = vmatpush.bf16.msra.mxu0 %v327
      %337 = vmatpush.bf16.msra.mxu0 %v326
      %338 = vmatpush.bf16.msra.mxu0 %v325
      %339 = vmatpush.bf16.msra.mxu0 %v324
      %340 = vmatpush.bf16.msra.mxu0 %v323
      %341 = vmatpush.bf16.msra.mxu0 %v322
      %342 = vmatpush.bf16.msra.mxu0 %v321
      %343 = vmatpush.bf16.msra.mxu0 %v320
      %344 = vmatmul.bf16.gmra.mxu0 %v271
      %v345 = vpop.f32.mrf.mxu0
      %v346 = vadd.f32 0.0, %v345
      %v347 = vpop.f32.mrf.mxu0
      %348 = vdwg.mxu0
      %v349 = vadd.f32 %v270, %v346
      %350 = vst [vmem:[#allocation2] sm:$0xff] %v349
      // Predicated region
      $region45: #{mtb_classification_head.1} parent=39 // pred_check
        %p351 = pneg %p265
      $region46: #{mtb_classification_head.1} parent=39 // pred_check_branch
        %353 = sbr.rel (%p351) target = $region48
      $region47: #{mtb_classification_head.1} parent=39 // pred_region
        %v354 = vld [vmem:[#allocation2] sm:$0xff]
        %v355 = vld [vmem:[%s2] sm:$0x1]
        %v357 = vperm.slane %v355, 0
        %v359 = vadd.f32 %v354, %v357
        %v360 = vtanh.pop %v359
        %v361 = vpack.c.bf16 %v360, %v360
        %v362 = vld [vmem:[%s3] sm:$0xf]
        %v363 = vld [vmem:[%s3 + $0x4] sm:$0xf]
        %v364 = vld [vmem:[%s3 + $0x8] sm:$0xf]
        %v365 = vld [vmem:[%s3 + $0xc] sm:$0xf]
        %v366 = vld [vmem:[%s3 + $0x10] sm:$0xf]
        %v367 = vld [vmem:[%s3 + $0x14] sm:$0xf]
        %v368 = vld [vmem:[%s3 + $0x18] sm:$0xf]
        %v369 = vld [vmem:[%s3 + $0x1c] sm:$0xf]
        %v370 = vld [vmem:[%s3 + $0x20] sm:$0xf]
        %v371 = vld [vmem:[%s3 + $0x24] sm:$0xf]
        %v372 = vld [vmem:[%s3 + $0x28] sm:$0xf]
        %v373 = vld [vmem:[%s3 + $0x2c] sm:$0xf]
        %v374 = vld [vmem:[%s3 + $0x30] sm:$0xf]
        %v375 = vld [vmem:[%s3 + $0x34] sm:$0xf]
        %v376 = vld [vmem:[%s3 + $0x38] sm:$0xf]
        %v377 = vld [vmem:[%s3 + $0x3c] sm:$0xf]
        %v378 = vld [vmem:[%s4] sm:$0x1]
        %v380 = vperm.slane %v378, 0
        %v398 = vunpack.c.l.b16 %v362
        %v399 = vunpack.c.l.b16 %v363
        %v400 = vunpack.c.l.b16 %v364
        %v401 = vunpack.c.l.b16 %v365
        %v402 = vunpack.c.l.b16 %v366
        %v403 = vunpack.c.l.b16 %v367
        %v404 = vunpack.c.l.b16 %v368
        %v405 = vunpack.c.l.b16 %v369
        %v406 = vunpack.c.l.b16 %v370
        %v407 = vunpack.c.l.b16 %v371
        %v408 = vunpack.c.l.b16 %v372
        %v409 = vunpack.c.l.b16 %v373
        %v410 = vunpack.c.l.b16 %v374
        %v411 = vunpack.c.l.b16 %v375
        %v412 = vunpack.c.l.b16 %v376
        %v413 = vunpack.c.l.b16 %v377
        %v414 = vpack.c.b16 %v399, %v398
        %v415 = vpack.c.b16 %v401, %v400
        %v416 = vpack.c.b16 %v403, %v402
        %v417 = vpack.c.b16 %v405, %v404
        %v418 = vpack.c.b16 %v407, %v406
        %v419 = vpack.c.b16 %v409, %v408
        %v420 = vpack.c.b16 %v411, %v410
        %v421 = vpack.c.b16 %v413, %v412
        %430 = vmatpush.bf16.msra.mxu0 %v421
        %431 = vmatpush.bf16.msra.mxu0 %v420
        %432 = vmatpush.bf16.msra.mxu0 %v419
        %433 = vmatpush.bf16.msra.mxu0 %v418
        %434 = vmatpush.bf16.msra.mxu0 %v417
        %435 = vmatpush.bf16.msra.mxu0 %v416
        %436 = vmatpush.bf16.msra.mxu0 %v415
        %437 = vmatpush.bf16.msra.mxu0 %v414
        %438 = vmatmul.bf16.gmra.mxu0 %v361
        %v439 = vpop.f32.mrf.mxu0
        %v440 = vadd.f32 %v380, %v439
        %v441 = vpop.f32.mrf.mxu0
        %442 = vdwg.mxu0
        %443 = vst [vmem:[%s264] sm:$0xff] %v440
      $region48: #{mtb_classification_head.1} parent=39 // pred_fallthru
        _
      %p444 = scmp.lt.s32.totalorder %s20, 1
      %s445 = scalar_select %p444, %s20, 1
      %s446 = smul.addr %s445, 8
      %s447 = scalar_lea.vmem %s5, %s446
      // Predicated region
      $region49: #{mtb_classification_head.1} parent=39 // pred_check
        %p448 = pneg %p163
      $region50: #{mtb_classification_head.1} parent=39 // pred_check_branch
        %450 = sbr.rel (%p448) target = $region52
      $region51: #{mtb_classification_head.1} parent=39 // pred_region
        _
      $region52: #{mtb_classification_head.1} parent=39 // pred_fallthru
        _
    $region40: #{mtb_classification_head.1} parent=5 // pred_fallthru
      _
    %p451 = scmp.le.s32.totalorder 2, %s11
    // Predicated region
    $region53: #{mtb_classification_head.1} parent=5 // pred_check
      %p452 = pneg %p451
    $region54: #{mtb_classification_head.1} parent=5 // pred_check_branch
      %454 = sbr.rel (%p452) target = $region56
    $region55: #{mtb_classification_head.1} parent=5 // pred_region
      %s455 = ssub.s32 %s11, 2
      // Predicated region
      $region57: #{mtb_classification_head.1} parent=55 // pred_check
        %p456 = pneg %p169
      $region58: #{mtb_classification_head.1} parent=55 // pred_check_branch
        %458 = sbr.rel (%p456) target = $region60
      $region59: #{mtb_classification_head.1} parent=55 // pred_region
        %p459 = scmp.lt.s32.totalorder %s22, 1
        %s460 = scalar_select %p459, %s22, 1
        %s461 = smul.addr %s460, 8
        %s462 = scalar_lea.vmem %s5, %s461
      $region60: #{mtb_classification_head.1} parent=55 // pred_fallthru
        _
    $region56: #{mtb_classification_head.1} parent=5 // pred_fallthru
      _
  $region6: #{mtb_classification_head.1} parent=0 // loop_footer
    %s15 = sadd.s32 1, %s11
  $region7: #{mtb_classification_head.1} parent=0 // loop_footer_branch
    %10 = sbr.rel target = $region3
  $region8: #{mtb_classification_head.1} parent=0 // loop_exit
    _

</llo_original>
